<compile_context>
chip_gen: v7x
topology: tpu7x:2x2x1
jax: 0.10.0
libtpu: 0.0.40
codegen_flags: <defaults>
</compile_context>

<pallas_src>
import jax
import jax.numpy as jnp
from jax import lax
from jax.experimental import pallas as pl
from jax.experimental.pallas import tpu as pltpu

EPS = 1e-5  # nn.LayerNorm default


# ----------------------------------------------------------------------------
# kernel: LayerNorm over channels on a (Bblk, C, T) block
# (channels = sublanes, spatial = lanes, batch = leading static dim).
# ----------------------------------------------------------------------------
def _pick_chunk(t, rows):
    """Largest lane chunk dividing `t` whose f32 working set stays small."""
    best = 128 if t % 128 == 0 else t
    for cand in (256, 512, 1024, 2048, 4096, 8192):
        if t % cand == 0 and rows * cand * 4 <= 256 * 1024:
            best = cand
    return min(best, t)


def _layernorm_kernel(x_ref, g_ref, b_ref, o_ref):
    bblk, c, t = x_ref.shape
    ch = _pick_chunk(t, bblk * c)           # static lane sub-chunk width
    n_chunks = t // ch
    inv_c = jnp.float32(1.0 / c)
    g = g_ref[...]                          # (C, 1), f32, lane-broadcast
    b = b_ref[...]

    def process(idx):
        j = idx * ch
        if not isinstance(j, int):
            j = pl.multiple_of(j, ch)
        for bi in range(bblk):              # static unroll over folded batch
            x = x_ref[bi, :, pl.ds(j, ch)].astype(jnp.float32)   # (C, CH)
            s = jnp.sum(x, axis=0, keepdims=True)                # one-pass stats
            s2 = jnp.sum(x * x, axis=0, keepdims=True)
            mu = s * inv_c
            var = jnp.maximum(s2 * inv_c - mu * mu, 0.0)         # clamp cancellation
            y = (x - mu) * lax.rsqrt(var + EPS) * g + b
            o_ref[bi, :, pl.ds(j, ch)] = y.astype(o_ref.dtype)

    if n_chunks == 1:
        process(0)
    else:
        def body(i, carry):
            process(i)
            return carry
        lax.fori_loop(0, n_chunks, body, 0, unroll=n_chunks <= 8)


# ----------------------------------------------------------------------------
# wrapper-side tiling helpers
# ----------------------------------------------------------------------------
def _largest_spatial_tile(hw_pad, bytes_per_lane, budget):
    """Largest multiple-of-128 tile dividing hw_pad within the byte budget."""
    m = hw_pad // 128
    best = 1
    for d in range(1, m + 1):
        if m % d == 0 and 128 * d * bytes_per_lane <= budget:
            best = d
    return 128 * best


# ----------------------------------------------------------------------------
# wrapper: NCHW in, NCHW out (matches the PyTorch module exactly)
# ----------------------------------------------------------------------------
def layernorm_nchw(x, gamma, beta):
    B, C, H, W = x.shape
    HW = H * W
    itemsize = x.dtype.itemsize

    # Generation-aware VMEM budget (64 MiB on v7x, 128 MiB on v5e/v6e).
    try:
        vmem_cap = int(pltpu.get_tpu_info().vmem_capacity_bytes)
    except Exception:
        vmem_cap = 64 * 1024 * 1024          # conservative (v7x per-core)
    # Per-block byte target: ~4x (double-buffered in + out) must fit with room.
    block_budget = max(1 << 20, min(vmem_cap // 8, 12 << 20))

    # Pad the spatial axis up to a multiple of 128 -> lane-dense unmasked vst.
    HW_pad = ((HW + 127) // 128) * 128
    x3 = x.reshape(B, C, HW)
    if HW_pad != HW:
        x3 = jnp.pad(x3, ((0, 0), (0, 0), (0, HW_pad - HW)))

    T = _largest_spatial_tile(HW_pad, C * itemsize, block_budget)

    # Fold batch into the block when the whole padded spatial axis fits.
    Bblk = 1
    if T == HW_pad and B > 1:
        for cand in range(B, 1, -1):
            if B % cand == 0 and cand * C * HW_pad * itemsize <= block_budget:
                Bblk = cand
                break
        # Keep >=2 grid steps for megacore when halving still gives >=1 MiB.
        if Bblk == B and (B // 2) * C * HW_pad * itemsize >= (1 << 20):
            for cand in range(B // 2, 0, -1):
                if B % cand == 0:
                    Bblk = cand
                    break

    block_bytes = Bblk * C * T * itemsize
    vmem_limit = 4 * block_bytes + (6 << 20)          # dbuf in/out + temps + slack
    vmem_limit = int(min(max(vmem_limit, 16 << 20), vmem_cap * 3 // 4))

    g2 = gamma.reshape(C, 1).astype(jnp.float32)
    b2 = beta.reshape(C, 1).astype(jnp.float32)

    out = pl.pallas_call(
        _layernorm_kernel,
        out_shape=jax.ShapeDtypeStruct((B, C, HW_pad), x.dtype),
        grid=(B // Bblk, HW_pad // T),
        in_specs=[
            pl.BlockSpec((Bblk, C, T), lambda b, t: (b, 0, t)),
            pl.BlockSpec((C, 1), lambda b, t: (0, 0)),
            pl.BlockSpec((C, 1), lambda b, t: (0, 0)),
        ],
        out_specs=pl.BlockSpec((Bblk, C, T), lambda b, t: (b, 0, t)),
        compiler_params=pltpu.CompilerParams(
            dimension_semantics=("parallel", "parallel"),
            vmem_limit_bytes=vmem_limit),
    )(x3, g2, b2)

    if HW_pad != HW:
        out = out[:, :, :HW]
    return out.reshape(B, C, H, W)


# ----------------------------------------------------------------------------
# pure-JAX reference (mirrors the PyTorch rearrange + nn.LayerNorm + rearrange)
# ----------------------------------------------------------------------------
def _layernorm_ref(x, gamma, beta):
    xt = jnp.transpose(x, (0, 2, 3, 1)).astype(jnp.float32)   # b h w c
    mu = jnp.mean(xt, axis=-1, keepdims=True)
    var = jnp.mean((xt - mu) ** 2, axis=-1, keepdims=True)
    y = (xt - mu) / jnp.sqrt(var + EPS) * gamma + beta
    return jnp.transpose(y, (0, 3, 1, 2))                     # b c h w


# ----------------------------------------------------------------------------
if __name__ == "__main__":
    key = jax.random.PRNGKey(0)
    kx, kg, kb, kx2, kg2, kb2 = jax.random.split(key, 6)

    # Primary small test: B=2, C=4, H=W=16.
    B, C, H, W = 2, 4, 16, 16
    x = jax.random.normal(kx, (B, C, H, W), jnp.float32)
    gamma = 1.0 + 0.02 * jax.random.normal(kg, (C,), jnp.float32)
    beta = 0.02 * jax.random.normal(kb, (C,), jnp.float32)

    out = jax.block_until_ready(layernorm_nchw(x, gamma, beta))
    ref = _layernorm_ref(x, gamma, beta)
    assert out.shape == (B, C, H, W)
    assert bool(jnp.all(jnp.isfinite(out)))
    err = float(jnp.max(jnp.abs(out - ref)))
    assert err < 2e-4, err

    # Non-128-divisible spatial size -> exercises the padded, tiled path.
    B2, C2, H2, W2 = 2, 32, 24, 24          # HW = 576 -> padded to 640
    x2 = jax.random.normal(kx2, (B2, C2, H2, W2), jnp.float32)
    gamma2 = 1.0 + 0.02 * jax.random.normal(kg2, (C2,), jnp.float32)
    beta2 = 0.02 * jax.random.normal(kb2, (C2,), jnp.float32)
    out2 = jax.block_until_ready(layernorm_nchw(x2, gamma2, beta2))
    ref2 = _layernorm_ref(x2, gamma2, beta2)
    err2 = float(jnp.max(jnp.abs(out2 - ref2)))
    assert err2 < 2e-4, err2

    # bf16 streaming path (storage/streaming bf16; statistics still f32).
    out_bf16 = jax.block_until_ready(
        layernorm_nchw(x.astype(jnp.bfloat16), gamma, beta))
    assert out_bf16.dtype == jnp.bfloat16
    assert bool(jnp.all(jnp.isfinite(out_bf16.astype(jnp.float32))))

    print("KERNEL_OK")
</pallas_src>

<mosaic_0001>
module attributes {stable_mosaic.version = 11 : i64} {
  func.func @_layernorm_kernel(%arg0: i32, %arg1: i32, %arg2: memref<2x4x256xf32, #tpu.memory_space<vmem>>, %arg3: memref<4x1xf32, #tpu.memory_space<vmem>>, %arg4: memref<4x1xf32, #tpu.memory_space<vmem>>, %arg5: memref<2x4x256xf32, #tpu.memory_space<vmem>>) attributes {dimension_semantics = [#tpu.dimension_semantics<parallel>, #tpu.dimension_semantics<parallel>], iteration_bounds = array<i64: 1, 1>, scalar_prefetch = 0 : i64, scratch_operands = 0 : i64, tpu.core_type = #tpu.core_type<tc>, window_params = [{transform_indices = @transform_0, window_bounds = array<i64: 2, 4, 256>}, {pipeline_mode = #tpu.pipeline_mode<synchronous>, transform_indices = @transform_1, window_bounds = array<i64: 4, 1>}, {pipeline_mode = #tpu.pipeline_mode<synchronous>, transform_indices = @transform_2, window_bounds = array<i64: 4, 1>}, {transform_indices = @transform_3, window_bounds = array<i64: 2, 4, 256>}]} {
    %c0 = arith.constant 0 : index
    %c0_0 = arith.constant 0 : index
    %0 = vector.load %arg3[%c0, %c0_0] : memref<4x1xf32, #tpu.memory_space<vmem>>, vector<4x1xf32>
    %c0_1 = arith.constant 0 : index
    %c0_2 = arith.constant 0 : index
    %1 = vector.load %arg4[%c0_1, %c0_2] : memref<4x1xf32, #tpu.memory_space<vmem>>, vector<4x1xf32>
    %c0_3 = arith.constant 0 : index
    %c0_4 = arith.constant 0 : index
    %c0_5 = arith.constant 0 : index
    %2 = vector.load %arg2[%c0_3, %c0_4, %c0_5] : memref<2x4x256xf32, #tpu.memory_space<vmem>>, vector<1x4x256xf32>
    %3 = vector.shape_cast %2 : vector<1x4x256xf32> to vector<4x256xf32>
    %cst = arith.constant dense<0.000000e+00> : vector<256xf32>
    %4 = vector.multi_reduction <add>, %3, %cst [0] : vector<4x256xf32> to vector<256xf32>
    %5 = vector.shape_cast %4 : vector<256xf32> to vector<1x256xf32>
    %6 = arith.mulf %3, %3 : vector<4x256xf32>
    %cst_6 = arith.constant dense<0.000000e+00> : vector<256xf32>
    %7 = vector.multi_reduction <add>, %6, %cst_6 [0] : vector<4x256xf32> to vector<256xf32>
    %8 = vector.shape_cast %7 : vector<256xf32> to vector<1x256xf32>
    %cst_7 = arith.constant 2.500000e-01 : f32
    %9 = vector.broadcast %cst_7 : f32 to vector<1x256xf32>
    %10 = arith.mulf %5, %9 : vector<1x256xf32>
    %cst_8 = arith.constant 2.500000e-01 : f32
    %11 = vector.broadcast %cst_8 : f32 to vector<1x256xf32>
    %12 = arith.mulf %8, %11 : vector<1x256xf32>
    %13 = arith.mulf %10, %10 : vector<1x256xf32>
    %14 = arith.subf %12, %13 : vector<1x256xf32>
    %cst_9 = arith.constant 0.000000e+00 : f32
    %15 = vector.broadcast %cst_9 : f32 to vector<1x256xf32>
    %16 = arith.maximumf %14, %15 : vector<1x256xf32>
    %17 = vector.broadcast %10 : vector<1x256xf32> to vector<4x256xf32>
    %18 = arith.subf %3, %17 : vector<4x256xf32>
    %cst_10 = arith.constant 9.99999974E-6 : f32
    %19 = vector.broadcast %cst_10 : f32 to vector<1x256xf32>
    %20 = arith.addf %16, %19 : vector<1x256xf32>
    %21 = math.rsqrt %20 : vector<1x256xf32>
    %22 = vector.broadcast %21 : vector<1x256xf32> to vector<4x256xf32>
    %23 = arith.mulf %18, %22 : vector<4x256xf32>
    %24 = vector.broadcast %0 : vector<4x1xf32> to vector<4x256xf32>
    %25 = arith.mulf %23, %24 : vector<4x256xf32>
    %26 = vector.broadcast %1 : vector<4x1xf32> to vector<4x256xf32>
    %27 = arith.addf %25, %26 : vector<4x256xf32>
    %c0_11 = arith.constant 0 : index
    %c0_12 = arith.constant 0 : index
    %c0_13 = arith.constant 0 : index
    %28 = vector.load %arg5[%c0_11, %c0_12, %c0_13] : memref<2x4x256xf32, #tpu.memory_space<vmem>>, vector<1x4x256xf32>
    %29 = vector.shape_cast %28 : vector<1x4x256xf32> to vector<4x256xf32>
    %30 = vector.shape_cast %27 : vector<4x256xf32> to vector<1x4x256xf32>
    tpu.vector_store %arg5[%c0_11, %c0_12, %c0_13], %30 {strides = array<i32>} : memref<2x4x256xf32, #tpu.memory_space<vmem>>, vector<1x4x256xf32>,
    %c1 = arith.constant 1 : index
    %c0_14 = arith.constant 0 : index
    %c0_15 = arith.constant 0 : index
    %31 = vector.load %arg2[%c1, %c0_14, %c0_15] : memref<2x4x256xf32, #tpu.memory_space<vmem>>, vector<1x4x256xf32>
    %32 = vector.shape_cast %31 : vector<1x4x256xf32> to vector<4x256xf32>
    %cst_16 = arith.constant dense<0.000000e+00> : vector<256xf32>
    %33 = vector.multi_reduction <add>, %32, %cst_16 [0] : vector<4x256xf32> to vector<256xf32>
    %34 = vector.shape_cast %33 : vector<256xf32> to vector<1x256xf32>
    %35 = arith.mulf %32, %32 : vector<4x256xf32>
    %cst_17 = arith.constant dense<0.000000e+00> : vector<256xf32>
    %36 = vector.multi_reduction <add>, %35, %cst_17 [0] : vector<4x256xf32> to vector<256xf32>
    %37 = vector.shape_cast %36 : vector<256xf32> to vector<1x256xf32>
    %cst_18 = arith.constant 2.500000e-01 : f32
    %38 = vector.broadcast %cst_18 : f32 to vector<1x256xf32>
    %39 = arith.mulf %34, %38 : vector<1x256xf32>
    %cst_19 = arith.constant 2.500000e-01 : f32
    %40 = vector.broadcast %cst_19 : f32 to vector<1x256xf32>
    %41 = arith.mulf %37, %40 : vector<1x256xf32>
    %42 = arith.mulf %39, %39 : vector<1x256xf32>
    %43 = arith.subf %41, %42 : vector<1x256xf32>
    %cst_20 = arith.constant 0.000000e+00 : f32
    %44 = vector.broadcast %cst_20 : f32 to vector<1x256xf32>
    %45 = arith.maximumf %43, %44 : vector<1x256xf32>
    %46 = vector.broadcast %39 : vector<1x256xf32> to vector<4x256xf32>
    %47 = arith.subf %32, %46 : vector<4x256xf32>
    %cst_21 = arith.constant 9.99999974E-6 : f32
    %48 = vector.broadcast %cst_21 : f32 to vector<1x256xf32>
    %49 = arith.addf %45, %48 : vector<1x256xf32>
    %50 = math.rsqrt %49 : vector<1x256xf32>
    %51 = vector.broadcast %50 : vector<1x256xf32> to vector<4x256xf32>
    %52 = arith.mulf %47, %51 : vector<4x256xf32>
    %53 = vector.broadcast %0 : vector<4x1xf32> to vector<4x256xf32>
    %54 = arith.mulf %52, %53 : vector<4x256xf32>
    %55 = vector.broadcast %1 : vector<4x1xf32> to vector<4x256xf32>
    %56 = arith.addf %54, %55 : vector<4x256xf32>
    %c1_22 = arith.constant 1 : index
    %c0_23 = arith.constant 0 : index
    %c0_24 = arith.constant 0 : index
    %57 = vector.load %arg5[%c1_22, %c0_23, %c0_24] : memref<2x4x256xf32, #tpu.memory_space<vmem>>, vector<1x4x256xf32>
    %58 = vector.shape_cast %57 : vector<1x4x256xf32> to vector<4x256xf32>
    %59 = vector.shape_cast %56 : vector<4x256xf32> to vector<1x4x256xf32>
    tpu.vector_store %arg5[%c1_22, %c0_23, %c0_24], %59 {strides = array<i32>} : memref<2x4x256xf32, #tpu.memory_space<vmem>>, vector<1x4x256xf32>,
    return
  }
  func.func @transform_0(%arg0: i32, %arg1: i32) -> (i32, i32, i32) {
    %c0_i32 = arith.constant 0 : i32
    %c0_i32_0 = arith.constant 0 : i32
    return %arg0, %c0_i32, %arg1 : i32, i32, i32
  }
  func.func @transform_1(%arg0: i32, %arg1: i32) -> (i32, i32) {
    %c0_i32 = arith.constant 0 : i32
    %c0_i32_0 = arith.constant 0 : i32
    %c0_i32_1 = arith.constant 0 : i32
    return %c0_i32, %c0_i32_0 : i32, i32
  }
  func.func @transform_2(%arg0: i32, %arg1: i32) -> (i32, i32) {
    %c0_i32 = arith.constant 0 : i32
    %c0_i32_0 = arith.constant 0 : i32
    %c0_i32_1 = arith.constant 0 : i32
    return %c0_i32, %c0_i32_0 : i32, i32
  }
  func.func @transform_3(%arg0: i32, %arg1: i32) -> (i32, i32, i32) {
    %c0_i32 = arith.constant 0 : i32
    %c0_i32_0 = arith.constant 0 : i32
    return %arg0, %c0_i32, %arg1 : i32, i32, i32
  }
}

</mosaic_0001>

<llo_original>
// kernel: tpu_custom_call.1
$region0: #{tpu_custom_call.1}
  #allocation0 [shape = 'u32[]', space=smem, size = 0x4, offset = 0x4, fixed_abs, tag = 'smem constant byte address 0x4 - core index']
  #allocation1 [shape = 'u32[144,128]{1,0:T(1,128)}', space=vmem, size = 0x12000, scoped, tag = 'internal scratch']
  %s0 = inlined_call_operand.hbm [shape: f32[2,4,256], index: 0, kind: input, shape index: {}]
  %s1 = inlined_call_operand.vmem [shape: f32[4,1], index: 1, kind: input, shape index: {}]
  %s2 = inlined_call_operand.vmem [shape: f32[4,1], index: 2, kind: input, shape index: {}]
  %s3 = inlined_call_operand.hbm [shape: f32[2,4,256], index: 3, kind: output, shape index: {}]
  %s4 = sld [smem:[#allocation0]]
  $region26: #{tpu_custom_call.1} parent=0
    _
  %s6 = ssub.s32 1, %s4
  %s7 = scalar_select 0, %s6, %s4
  $region1: #{tpu_custom_call.1} parent=0
    #allocation2 [shape = 'u8[8192]{0}', space=vmem, size = 0x2000, scoped, tag = 'input window, operand 0, single buffered']
    #allocation3 [shape = 's32[1]{0}', space=sflag, size = 0x4, scoped, tag = 'scoped memory for tpu_custom_call.1']
    #allocation4 [shape = 's32[1]{0}', space=sflag, size = 0x4, scoped, tag = 'scoped memory for tpu_custom_call.1']
    #allocation5 [shape = 'u8[8192]{0}', space=vmem, size = 0x2000, scoped, tag = 'output window, operand 0, single buffered']
    %8 = vsyncpa [#allocation3], 0
    %9 = vsyncpa [#allocation4], 0
    // Predicated region
    $region2: #{tpu_custom_call.1} parent=1 // pred_check
      _
    $region3: #{tpu_custom_call.1} parent=1 // pred_check_branch
      %11 = sbr.rel (0) target = $region5
    $region4: #{tpu_custom_call.1} parent=1 // pred_region
      %s13 = ssub.s32 256, 256
      %14 = vsyncadd [#allocation3], %s13
      %s15 = sshll.u32 [#allocation2], 4
      %s16 = int_to_ptr.vmem [resolvable:$true] %s15
      %21 = dma.hbm_to_vmem [thread:$0]  %s0, 256, %s16, [#allocation3], 128, 128, 8
    $region5: #{tpu_custom_call.1} parent=1 // pred_fallthru
      _
    // Predicated region
    $region6: #{tpu_custom_call.1} parent=1 // pred_check
      _
    $region7: #{tpu_custom_call.1} parent=1 // pred_check_branch
      %23 = sbr.rel (0) target = $region9
    $region8: #{tpu_custom_call.1} parent=1 // pred_region
      _
    $region9: #{tpu_custom_call.1} parent=1 // pred_fallthru
      _
    // Predicated region
    $region10: #{tpu_custom_call.1} parent=1 // pred_check
      _
    $region11: #{tpu_custom_call.1} parent=1 // pred_check_branch
      %25 = sbr.rel (0) target = $region13
    $region12: #{tpu_custom_call.1} parent=1 // pred_region
      _
    $region13: #{tpu_custom_call.1} parent=1 // pred_fallthru
      _
    // Predicated region
    $region14: #{tpu_custom_call.1} parent=1 // pred_check
      _
    $region15: #{tpu_custom_call.1} parent=1 // pred_check_branch
      %27 = sbr.rel (0) target = $region17
    $region16: #{tpu_custom_call.1} parent=1 // pred_region
      %28 = dma.done [#allocation3], 256
    $region17: #{tpu_custom_call.1} parent=1 // pred_fallthru
      _
    %v29 = vld [vmem:[%s1] sm:$0xf]
    %v30 = vld [vmem:[%s2] sm:$0xf]
    %v31 = vld [vmem:[#allocation2] sm:$0xff]
    %v33 = vcombine.high %v31, %v31
    %vm35 = vcmask 1043456
    %v36 = vsel %vm35, %v31, 0.0
    %v37 = vrot.slane %v36, 4
    %v38 = vadd.f32 %v36, %v37
    %v39 = vrot.slane %v38, 2
    %v40 = vadd.f32 %v38, %v39
    %v41 = vrot.slane %v40, 1
    %v42 = vadd.f32 %v40, %v41
    %v43 = vsel %vm35, %v33, 0.0
    %v44 = vrot.slane %v43, 4
    %v45 = vadd.f32 %v43, %v44
    %v46 = vrot.slane %v45, 2
    %v47 = vadd.f32 %v45, %v46
    %v48 = vrot.slane %v47, 1
    %v49 = vadd.f32 %v47, %v48
    %v50 = vmul.f32 %v31, %v31
    %v52 = vcombine.high %v50, %v50
    %v54 = vsel %vm35, %v50, 0.0
    %v55 = vrot.slane %v54, 4
    %v56 = vadd.f32 %v54, %v55
    %v57 = vrot.slane %v56, 2
    %v58 = vadd.f32 %v56, %v57
    %v59 = vrot.slane %v58, 1
    %v60 = vadd.f32 %v58, %v59
    %v61 = vsel %vm35, %v52, 0.0
    %v62 = vrot.slane %v61, 4
    %v63 = vadd.f32 %v61, %v62
    %v64 = vrot.slane %v63, 2
    %v65 = vadd.f32 %v63, %v64
    %v66 = vrot.slane %v65, 1
    %v67 = vadd.f32 %v65, %v66
    %v68 = vmul.f32 %v42, 0.25
    %v69 = vmul.f32 %v49, 0.25
    %v70 = vmul.f32 %v60, 0.25
    %v71 = vmul.f32 %v67, 0.25
    %v72 = vmul.f32 %v68, %v68
    %v73 = vmul.f32 %v69, %v69
    %v74 = vsub.f32 %v70, %v72
    %v75 = vsub.f32 %v71, %v73
    %v76 = vmax.f32 %v74, 0.0
    %v77 = vmax.f32 %v75, 0.0
    %v80 = vcombine.low %v68, %v69
    %v82 = vsub.f32 %v31, %v80
    %v83 = vadd.f32 %v76, 1e-05
    %v84 = vadd.f32 %v77, 1e-05
    %v85 = vrsqrt.pop %v83
    %v86 = vrsqrt.pop %v84
    %v89 = vcombine.low %v85, %v86
    %v91 = vmul.f32 %v82, %v89
    %93 = vset.pattern.permute.xlu0 0
    %94 = vperm.xlu0 %93, %v29
    %v95 = vpop.permute.xlu0 %94
    %v97 = vunpack.c.l.s4 839922192
    %v98 = vunpack.c.0.s8 %v97
    %v99 = vlaneseq
    %v100 = vshrl.u32 %v99, 7
    %v101 = vsub.s32 %v98, %v100
    %v102 = vrot.slane %v95, %v101
    %v104 = vmul.f32 %v91, %v102
    %106 = vset.pattern.permute.xlu0 0
    %107 = vperm.xlu0 %106, %v30
    %v108 = vpop.permute.xlu0 %107
    %v110 = vunpack.c.l.s4 839922192
    %v111 = vunpack.c.0.s8 %v110
    %v112 = vlaneseq
    %v113 = vshrl.u32 %v112, 7
    %v114 = vsub.s32 %v111, %v113
    %v115 = vrot.slane %v108, %v114
    %v117 = vadd.f32 %v104, %v115
    %118 = vst [vmem:[#allocation5] sm:$0xff] %v117
    %s119 = scalar_lea.vmem [#allocation2], 8
    %v120 = vld [vmem:[%s119] sm:$0xff]
    %v122 = vcombine.high %v120, %v120
    %v124 = vsel %vm35, %v120, 0.0
    %v125 = vrot.slane %v124, 4
    %v126 = vadd.f32 %v124, %v125
    %v127 = vrot.slane %v126, 2
    %v128 = vadd.f32 %v126, %v127
    %v129 = vrot.slane %v128, 1
    %v130 = vadd.f32 %v128, %v129
    %v131 = vsel %vm35, %v122, 0.0
    %v132 = vrot.slane %v131, 4
    %v133 = vadd.f32 %v131, %v132
    %v134 = vrot.slane %v133, 2
    %v135 = vadd.f32 %v133, %v134
    %v136 = vrot.slane %v135, 1
    %v137 = vadd.f32 %v135, %v136
    %v138 = vmul.f32 %v120, %v120
    %v140 = vcombine.high %v138, %v138
    %v142 = vsel %vm35, %v138, 0.0
    %v143 = vrot.slane %v142, 4
    %v144 = vadd.f32 %v142, %v143
    %v145 = vrot.slane %v144, 2
    %v146 = vadd.f32 %v144, %v145
    %v147 = vrot.slane %v146, 1
    %v148 = vadd.f32 %v146, %v147
    %v149 = vsel %vm35, %v140, 0.0
    %v150 = vrot.slane %v149, 4
    %v151 = vadd.f32 %v149, %v150
    %v152 = vrot.slane %v151, 2
    %v153 = vadd.f32 %v151, %v152
    %v154 = vrot.slane %v153, 1
    %v155 = vadd.f32 %v153, %v154
    %v156 = vmul.f32 %v130, 0.25
    %v157 = vmul.f32 %v137, 0.25
    %v158 = vmul.f32 %v148, 0.25
    %v159 = vmul.f32 %v155, 0.25
    %v160 = vmul.f32 %v156, %v156
    %v161 = vmul.f32 %v157, %v157
    %v162 = vsub.f32 %v158, %v160
    %v163 = vsub.f32 %v159, %v161
    %v164 = vmax.f32 %v162, 0.0
    %v165 = vmax.f32 %v163, 0.0
    %v168 = vcombine.low %v156, %v157
    %v170 = vsub.f32 %v120, %v168
    %v171 = vadd.f32 %v164, 1e-05
    %v172 = vadd.f32 %v165, 1e-05
    %v173 = vrsqrt.pop %v171
    %v174 = vrsqrt.pop %v172
    %v177 = vcombine.low %v173, %v174
    %v179 = vmul.f32 %v170, %v177
    %v180 = vmul.f32 %v179, %v102
    %v181 = vadd.f32 %v180, %v115
    %s182 = scalar_lea.vmem [#allocation5], 8
    %183 = vst [vmem:[%s182] sm:$0xff] %v181
    // Predicated region
    $region18: #{tpu_custom_call.1} parent=1 // pred_check
      _
    $region19: #{tpu_custom_call.1} parent=1 // pred_check_branch
      %185 = sbr.rel (0) target = $region21
    $region20: #{tpu_custom_call.1} parent=1 // pred_region
      %s187 = ssub.s32 256, 256
      %188 = vsyncadd [#allocation4], %s187
      %s189 = sshll.u32 [#allocation5], 4
      %s190 = int_to_ptr.vmem [resolvable:$true] %s189
      %195 = dma.vmem_to_hbm [thread:$0]  %s190, 256, %s3, [#allocation4], 128, 128, 8
    $region21: #{tpu_custom_call.1} parent=1 // pred_fallthru
      _
    // Predicated region
    $region22: #{tpu_custom_call.1} parent=1 // pred_check
      _
    $region23: #{tpu_custom_call.1} parent=1 // pred_check_branch
      %197 = sbr.rel (0) target = $region25
    $region24: #{tpu_custom_call.1} parent=1 // pred_region
      %198 = dma.done [#allocation4], 256
    $region25: #{tpu_custom_call.1} parent=1 // pred_fallthru
      _
    %199 = vsyncpa [#allocation3], 1
    %200 = vsyncpa [#allocation4], 1

</llo_original>
